<compile_context>
chip_gen: v7x
topology: tpu7x:2x2x1
jax: 0.10.0
libtpu: 0.0.40
codegen_flags: <defaults>
</compile_context>

<pallas_src>
import jax
import jax.numpy as jnp
from jax.experimental import pallas as pl
from jax.experimental.pallas import tpu as pltpu

_LANE = 128
_WIDTH_CANDIDATES = (8192, 4096, 2048, 1024, 512, 256, 128)


def _thresholded_relu_kernel(thr_ref, x_ref, o_ref):
    x = x_ref[...]
    # PyTorch casts the python-float threshold to the tensor dtype; match that
    # so strict '>' behaves identically for bf16 / low-precision inputs.
    thr = thr_ref[0].astype(x.dtype)
    o_ref[...] = jnp.where(x > thr, x, jnp.zeros_like(x))


def _pick_lane_width(n):
    """Return (lane_width, needs_pad).

    Prefer the widest candidate that divides n exactly (no pad/slice HBM
    passes). If nothing down to 128 divides, padding is unavoidable; pick a
    width wide enough for dense stores but with negligible (<~6%) pad cost.
    """
    for cand in _WIDTH_CANDIDATES:
        if n % cand == 0:
            return cand, False
    lane_width = _LANE
    for cand in (8192, 4096, 2048, 1024, 512, 256):
        if n >= 16 * cand:
            lane_width = cand
            break
    return lane_width, True


def thresholded_relu(x, threshold=0.1, inplace=False):
    """Elementwise thresholded ReLU via a Pallas TPU kernel (any shape/dtype)."""
    orig_shape = x.shape
    dtype = x.dtype
    flat = x.reshape(-1)
    n = flat.shape[0]
    if n == 0:
        return x

    lane_width, needs_pad = _pick_lane_width(n)
    n_pad = pl.cdiv(n, lane_width) * lane_width
    if needs_pad:
        # Pad + final slice each cost a full extra HBM pass; only taken when
        # n is not a multiple of 128 (documented per perf review).
        flat = jnp.pad(flat, (0, n_pad - n))
    rows = n_pad // lane_width
    x2d = flat.reshape(rows, lane_width)

    itemsize = jnp.dtype(dtype).itemsize
    sublane = {4: 8, 2: 16, 1: 32}.get(itemsize, 8)
    row_bytes = lane_width * itemsize
    total_bytes = rows * row_bytes

    TARGET_BLOCK_BYTES = 4 * 1024 * 1024   # ~4 MiB/buffer: 16 MiB pipelined footprint
    MIN_PARALLEL_BYTES = 512 * 1024        # below this, a single block is cheapest

    if total_bytes < MIN_PARALLEL_BYTES or rows <= sublane:
        # Tiny input: single full-extent block (full-dim block is always legal).
        block_rows = rows
        num_blocks = 1
    else:
        block_rows_target = max(
            sublane, (TARGET_BLOCK_BYTES // row_bytes) // sublane * sublane
        )
        num_blocks = pl.cdiv(rows, block_rows_target)
        # v7x shards the "parallel" grid axis across its 2 TensorCores:
        # guarantee >= 2 blocks, and an even count when the grid is small.
        num_blocks = max(num_blocks, 2)
        if num_blocks % 2 == 1 and num_blocks <= 16:
            num_blocks += 1
        block_rows = pl.cdiv(pl.cdiv(rows, num_blocks), sublane) * sublane
        num_blocks = pl.cdiv(rows, block_rows)

    thr_arr = jnp.asarray([threshold], dtype=jnp.float32)

    cost = pl.CostEstimate(
        flops=n, transcendentals=0, bytes_accessed=2 * n * itemsize
    )

    out2d = pl.pallas_call(
        _thresholded_relu_kernel,
        out_shape=jax.ShapeDtypeStruct((rows, lane_width), dtype),
        grid_spec=pltpu.PrefetchScalarGridSpec(
            num_scalar_prefetch=0,
            grid=(num_blocks,),
            in_specs=[
                pl.BlockSpec(memory_space=pltpu.MemorySpace.SMEM),   # threshold scalar
                pl.BlockSpec((block_rows, lane_width), lambda i: (i, 0)),
            ],
            out_specs=pl.BlockSpec((block_rows, lane_width), lambda i: (i, 0)),
        ),
        compiler_params=pltpu.CompilerParams(
            dimension_semantics=("parallel",),
            vmem_limit_bytes=32 * 1024 * 1024,
        ),
        cost_estimate=cost,
        # PyTorch inplace=True analogue: write the result into x's buffer.
        input_output_aliases={1: 0} if inplace else {},
    )(thr_arr, x2d)

    out = out2d.reshape(-1)
    if needs_pad:
        out = out[:n]
    return out.reshape(orig_shape)


if __name__ == "__main__":
    key = jax.random.PRNGKey(0)

    # 1) NCHW input like PyTorch: batch=2, channels=4, spatial=16x16 (f32).
    x = jax.random.normal(key, (2, 4, 16, 16), dtype=jnp.float32)
    threshold = 0.1
    y = jax.block_until_ready(thresholded_relu(x, threshold=threshold))
    y_ref = jnp.where(x > threshold, x, jnp.zeros_like(x))
    assert y.shape == x.shape and y.dtype == x.dtype
    assert jnp.allclose(y, y_ref), "mismatch vs reference (f32)"

    # 2) Small odd shape: exercises the lane-pad + slice path (negative threshold
    #    makes padded zeros 'pass' the threshold; they are sliced away).
    x2 = jax.random.normal(jax.random.PRNGKey(1), (2, 3, 7, 5), dtype=jnp.float32)
    y2 = jax.block_until_ready(thresholded_relu(x2, threshold=-0.05))
    y2_ref = jnp.where(x2 > -0.05, x2, jnp.zeros_like(x2))
    assert y2.shape == x2.shape and jnp.allclose(y2, y2_ref), "mismatch (odd shape)"

    # 3) Mid-size input (2 MiB): exercises the multi-block (>= 2, parallel) path.
    x3 = jax.random.normal(jax.random.PRNGKey(2), (8, 64, 32, 32), dtype=jnp.float32)
    y3 = jax.block_until_ready(thresholded_relu(x3, threshold=0.25))
    y3_ref = jnp.where(x3 > 0.25, x3, jnp.zeros_like(x3))
    assert jnp.allclose(y3, y3_ref), "mismatch (multi-block)"

    # 4) bf16 input: threshold is cast to bf16 inside the kernel (PyTorch semantics).
    xb = jax.random.normal(jax.random.PRNGKey(3), (2, 4, 16, 16), dtype=jnp.bfloat16)
    yb = jax.block_until_ready(thresholded_relu(xb, threshold=0.1))
    thr_b = jnp.asarray(0.1, dtype=jnp.bfloat16)
    yb_ref = jnp.where(xb > thr_b, xb, jnp.zeros_like(xb))
    assert yb.dtype == xb.dtype and jnp.allclose(yb, yb_ref), "mismatch (bf16)"

    # 5) inplace=True analogue: alias x's buffer via donation under jit.
    xi = jax.random.normal(jax.random.PRNGKey(4), (2, 4, 16, 16), dtype=jnp.float32)
    yi_ref = jnp.where(xi > 0.1, xi, jnp.zeros_like(xi))  # computed before donation
    inplace_fn = jax.jit(
        lambda a: thresholded_relu(a, threshold=0.1, inplace=True), donate_argnums=0
    )
    yi = jax.block_until_ready(inplace_fn(xi))
    # xi is donated; do not use it past this point.
    assert jnp.allclose(yi, yi_ref), "mismatch (inplace/aliased)"

    print("KERNEL_OK")
</pallas_src>

<mosaic_0001>
module attributes {stable_mosaic.version = 11 : i64} {
  func.func @_thresholded_relu_kernel(%arg0: i32, %arg1: memref<1xf32, #tpu.memory_space<smem>>, %arg2: memref<1x2048xf32, #tpu.memory_space<vmem>>, %arg3: memref<1x2048xf32, #tpu.memory_space<vmem>>) attributes {dimension_semantics = [#tpu.dimension_semantics<parallel>], iteration_bounds = array<i64: 1>, scalar_prefetch = 0 : i64, scratch_operands = 0 : i64, tpu.core_type = #tpu.core_type<tc>, window_params = [{transform_indices = @transform_0, window_bounds = array<i64: 1>}, {transform_indices = @transform_1, window_bounds = array<i64: 1, 2048>}, {transform_indices = @transform_2, window_bounds = array<i64: 1, 2048>}]} {
    %c0 = arith.constant 0 : index
    %c0_0 = arith.constant 0 : index
    %0 = vector.load %arg2[%c0, %c0_0] : memref<1x2048xf32, #tpu.memory_space<vmem>>, vector<1x2048xf32>
    %c0_1 = arith.constant 0 : index
    %1 = memref.load %arg1[%c0_1] : memref<1xf32, #tpu.memory_space<smem>>
    %2 = vector.broadcast %1 : f32 to vector<1x2048xf32>
    %3 = arith.cmpf ogt, %0, %2 : vector<1x2048xf32>
    %cst = arith.constant 0.000000e+00 : f32
    %4 = vector.broadcast %cst : f32 to vector<1x2048xf32>
    %5 = arith.select %3, %0, %4 : vector<1x2048xi1>, vector<1x2048xf32>
    %c0_2 = arith.constant 0 : index
    %c0_3 = arith.constant 0 : index
    %6 = vector.load %arg3[%c0_2, %c0_3] : memref<1x2048xf32, #tpu.memory_space<vmem>>, vector<1x2048xf32>
    tpu.vector_store %arg3[%c0_2, %c0_3], %5 {strides = array<i32>} : memref<1x2048xf32, #tpu.memory_space<vmem>>, vector<1x2048xf32>,
    return
  }
  func.func @transform_0(%arg0: i32) -> i32 {
    %c0_i32 = arith.constant 0 : i32
    %c0_i32_0 = arith.constant 0 : i32
    return %c0_i32 : i32
  }
  func.func @transform_1(%arg0: i32) -> (i32, i32) {
    %c0_i32 = arith.constant 0 : i32
    %c0_i32_0 = arith.constant 0 : i32
    return %arg0, %c0_i32 : i32, i32
  }
  func.func @transform_2(%arg0: i32) -> (i32, i32) {
    %c0_i32 = arith.constant 0 : i32
    %c0_i32_0 = arith.constant 0 : i32
    return %arg0, %c0_i32 : i32, i32
  }
}

</mosaic_0001>

<llo_original>
// kernel: tpu_custom_call.1
$region0: #{tpu_custom_call.1}
  #allocation0 [shape = 'u32[]', space=smem, size = 0x4, offset = 0x4, fixed_abs, tag = 'smem constant byte address 0x4 - core index']
  #allocation1 [shape = 'u32[144,128]{1,0:T(1,128)}', space=vmem, size = 0x12000, scoped, tag = 'internal scratch']
  #allocation2 [shape = 'f32[1]{0:T(128)S(6)}', space=smem, size = 0x200, scoped, tag = 'scoped memory for tpu_custom_call.1']
  %s0 = inlined_call_operand.<no memory space> [shape: f32[1], index: 0, kind: input, shape index: {}]
  %s1 = inlined_call_operand.hbm [shape: f32[1,2048], index: 1, kind: input, shape index: {}]
  %s2 = inlined_call_operand.hbm [shape: f32[1,2048], index: 2, kind: output, shape index: {}]
  %s3 = sld [smem:[#allocation0]]
  $region22: #{tpu_custom_call.1} parent=0
    _
  %s5 = ssub.s32 1, %s3
  %s6 = scalar_select 0, %s5, %s3
  %7 = sst [smem:[#allocation2]] %s0
  $region1: #{tpu_custom_call.1} parent=0
    #allocation3 [shape = 'u8[8192]{0}', space=vmem, size = 0x2000, scoped, tag = 'input window, operand 1, single buffered']
    #allocation4 [shape = 's32[1]{0}', space=sflag, size = 0x4, scoped, tag = 'scoped memory for tpu_custom_call.1']
    #allocation5 [shape = 's32[1]{0}', space=sflag, size = 0x4, scoped, tag = 'scoped memory for tpu_custom_call.1']
    #allocation6 [shape = 'u8[8192]{0}', space=vmem, size = 0x2000, scoped, tag = 'output window, operand 0, single buffered']
    %8 = vsyncpa [#allocation4], 0
    %9 = vsyncpa [#allocation5], 0
    // Predicated region
    $region2: #{tpu_custom_call.1} parent=1 // pred_check
      _
    $region3: #{tpu_custom_call.1} parent=1 // pred_check_branch
      %11 = sbr.rel (0) target = $region5
    $region4: #{tpu_custom_call.1} parent=1 // pred_region
      _
    $region5: #{tpu_custom_call.1} parent=1 // pred_fallthru
      _
    // Predicated region
    $region6: #{tpu_custom_call.1} parent=1 // pred_check
      _
    $region7: #{tpu_custom_call.1} parent=1 // pred_check_branch
      %13 = sbr.rel (0) target = $region9
    $region8: #{tpu_custom_call.1} parent=1 // pred_region
      %s15 = ssub.s32 256, 256
      %16 = vsyncadd [#allocation4], %s15
      %s18 = sshll.u32 [#allocation3], 4
      %s19 = int_to_ptr.vmem [resolvable:$true] %s18
      %21 = dma.hbm_to_vmem [thread:$0]  %s1, 256, %s19, [#allocation4]
    $region9: #{tpu_custom_call.1} parent=1 // pred_fallthru
      _
    // Predicated region
    $region10: #{tpu_custom_call.1} parent=1 // pred_check
      _
    $region11: #{tpu_custom_call.1} parent=1 // pred_check_branch
      %23 = sbr.rel (0) target = $region13
    $region12: #{tpu_custom_call.1} parent=1 // pred_region
      %24 = dma.done [#allocation4], 256
    $region13: #{tpu_custom_call.1} parent=1 // pred_fallthru
      _
    %v25 = vld [vmem:[#allocation3] sm:$0xff]
    %v26 = vld [vmem:[#allocation3 + $0x8] sm:$0xff]
    %s27 = sld [smem:[#allocation2]]
    %v28 = vstv %s27
    %vm29 = vcmp.gt.f32.partialorder %v25, %v28
    %vm30 = vcmp.gt.f32.partialorder %v26, %v28
    %v31 = vsel %vm29, %v25, 0.0
    %v32 = vsel %vm30, %v26, 0.0
    %33 = vst [vmem:[#allocation6] sm:$0xff] %v31
    %34 = vst [vmem:[#allocation6 + $0x8] sm:$0xff] %v32
    // Predicated region
    $region14: #{tpu_custom_call.1} parent=1 // pred_check
      _
    $region15: #{tpu_custom_call.1} parent=1 // pred_check_branch
      %36 = sbr.rel (0) target = $region17
    $region16: #{tpu_custom_call.1} parent=1 // pred_region
      %s38 = ssub.s32 256, 256
      %39 = vsyncadd [#allocation5], %s38
      %s41 = sshll.u32 [#allocation6], 4
      %s42 = int_to_ptr.vmem [resolvable:$true] %s41
      %44 = dma.vmem_to_hbm [thread:$0]  %s42, 256, %s2, [#allocation5]
    $region17: #{tpu_custom_call.1} parent=1 // pred_fallthru
      _
    // Predicated region
    $region18: #{tpu_custom_call.1} parent=1 // pred_check
      _
    $region19: #{tpu_custom_call.1} parent=1 // pred_check_branch
      %46 = sbr.rel (0) target = $region21
    $region20: #{tpu_custom_call.1} parent=1 // pred_region
      %47 = dma.done [#allocation5], 256
    $region21: #{tpu_custom_call.1} parent=1 // pred_fallthru
      _
    %48 = vsyncpa [#allocation4], 1
    %49 = vsyncpa [#allocation5], 1

</llo_original>
